<compile_context>
chip_gen: v7x
topology: tpu7x:2x2x1
jax: 0.10.0
libtpu: 0.0.40
codegen_flags: <defaults>
</compile_context>

<pallas_src>
import jax
import jax.numpy as jnp
from jax.experimental import pallas as pl
from jax.experimental.pallas import tpu as pltpu


def _round_up(x, m):
    return (x + m - 1) // m * m


def _ffn_kernel(x_ref, w12_ref, w3t_ref, o_ref, acc_ref):
    # x_ref:   (tm, H)        token tile
    # w12_ref: (H, 2*tI)      [W1^T tile | W2^T tile] for the current I tile
    # w3t_ref: (tI, H)        W3^T tile for the current I tile
    # o_ref:   (tm, H)
    # acc_ref: (tm, H) f32    accumulator over I tiles (VMEM scratch)
    j = pl.program_id(1)
    ti = w3t_ref.shape[0]

    @pl.when(j == 0)
    def _():
        acc_ref[...] = jnp.zeros_like(acc_ref)

    x = x_ref[...]
    # Fused gate+up projection: one MXU matmul per I tile.
    h = jnp.dot(x, w12_ref[...], preferred_element_type=jnp.float32)
    h1 = h[:, :ti]                                # gate pre-activation (f32)
    h2 = h[:, ti:]                                # up projection       (f32)
    g = (h1 * jax.nn.sigmoid(h1)) * h2            # SwiGLU in f32
    acc_ref[...] += jnp.dot(g.astype(x.dtype), w3t_ref[...],
                            preferred_element_type=jnp.float32)

    @pl.when(j == pl.num_programs(1) - 1)
    def _():
        o_ref[...] = acc_ref[...].astype(o_ref.dtype)


def feed_forward(x, w1, w2, w3, *, tm=256, ti=1024, compute_dtype=None):
    """SwiGLU feed-forward.

    x:  (..., H) activations.
    w1: (I, H), w2: (I, H), w3: (H, I)  -- PyTorch nn.Linear (out, in) layout.
    compute_dtype: optional matmul-operand dtype (e.g. jnp.bfloat16);
                   accumulation is always f32, output keeps x.dtype.
    """
    orig_shape = x.shape
    I, H = w1.shape
    assert w2.shape == (I, H) and w3.shape == (H, I)
    out_dtype = x.dtype

    if compute_dtype is not None:
        x = x.astype(compute_dtype)
        w1 = w1.astype(compute_dtype)
        w2 = w2.astype(compute_dtype)
        w3 = w3.astype(compute_dtype)

    x2d = x.reshape(-1, H)
    M = x2d.shape[0]

    # ---- token (M) tiling; zero-pad ragged tails (padded rows sliced off) ----
    if M <= tm:
        tm = max(_round_up(M, 8), 8)
    Mp = _round_up(M, tm)
    if Mp != M:
        x2d = jnp.pad(x2d, ((0, Mp - M), (0, 0)))

    # ---- intermediate (I) tiling; weights streamed tile-by-tile ----
    w1t, w2t, w3t = w1.T, w2.T, w3.T            # (H, I), (H, I), (I, H) -- glue
    if I <= ti:
        ti = _round_up(I, 128)                  # one lane-aligned tile
    else:
        ti = _round_up(ti, 128)
    Ip = _round_up(I, ti)
    if Ip != I:
        # Zero-padding the intermediate dim is exact: silu(0) * 0 == 0.
        w1t = jnp.pad(w1t, ((0, 0), (0, Ip - I)))
        w2t = jnp.pad(w2t, ((0, 0), (0, Ip - I)))
        w3t = jnp.pad(w3t, ((0, Ip - I), (0, 0)))
    n_i = Ip // ti

    # Fused gate/up RHS: for I-tile j, columns [2*ti*j : 2*ti*(j+1)] hold
    # [W1^T tile j | W2^T tile j].
    w12t = jnp.concatenate(
        [w1t.reshape(H, n_i, ti), w2t.reshape(H, n_i, ti)], axis=2
    ).reshape(H, 2 * Ip)

    # ---- VMEM budget: double-buffered I/O blocks + f32 accumulator ----
    cbytes = jnp.dtype(x2d.dtype).itemsize
    obytes = jnp.dtype(out_dtype).itemsize
    est = 2 * ((tm * H + H * 2 * ti + ti * H) * cbytes + tm * H * obytes)
    est += tm * H * 4
    vmem_limit = int(min(max(est * 3 // 2, 32 * 1024 * 1024),
                         128 * 1024 * 1024))

    grid = (Mp // tm, n_i)
    out2d = pl.pallas_call(
        _ffn_kernel,
        out_shape=jax.ShapeDtypeStruct((Mp, H), out_dtype),
        grid_spec=pltpu.PrefetchScalarGridSpec(
            num_scalar_prefetch=0,
            grid=grid,
            in_specs=[
                pl.BlockSpec((tm, H), lambda i, j: (i, 0)),       # x tile
                pl.BlockSpec((H, 2 * ti), lambda i, j: (0, j)),   # [W1^T|W2^T]
                pl.BlockSpec((ti, H), lambda i, j: (j, 0)),       # W3^T tile
            ],
            out_specs=pl.BlockSpec((tm, H), lambda i, j: (i, 0)),
            scratch_shapes=[pltpu.VMEM((tm, H), jnp.float32)],
        ),
        compiler_params=pltpu.CompilerParams(
            dimension_semantics=("parallel", "arbitrary"),
            vmem_limit_bytes=vmem_limit,
        ),
    )(x2d, w12t, w3t)

    if Mp != M:
        out2d = out2d[:M]
    return out2d.reshape(orig_shape)


def feed_forward_ref(x, w1, w2, w3):
    h1 = x @ w1.T
    x1 = h1 * jax.nn.sigmoid(h1)
    x2 = x @ w2.T
    return (x1 * x2) @ w3.T


if __name__ == "__main__":
    # --- Test 1: tiny shapes (single tile), f32, strict tolerance ---
    B, S, H, I = 2, 8, 32, 64
    kx, k1, k2, k3 = jax.random.split(jax.random.PRNGKey(0), 4)
    x = jax.random.normal(kx, (B, S, H), dtype=jnp.float32)
    w1 = jax.random.normal(k1, (I, H), dtype=jnp.float32) * (1.0 / H ** 0.5)
    w2 = jax.random.normal(k2, (I, H), dtype=jnp.float32) * (1.0 / H ** 0.5)
    w3 = jax.random.normal(k3, (H, I), dtype=jnp.float32) * (1.0 / I ** 0.5)

    out = jax.block_until_ready(feed_forward(x, w1, w2, w3))
    ref = feed_forward_ref(x, w1, w2, w3)
    assert out.shape == (B, S, H)
    assert jnp.allclose(out, ref, atol=1e-4, rtol=1e-4), "mismatch (tiny f32)"

    # --- Test 2: multi-tile grid over M and I, ragged token count, f32 ---
    B2, S2, H2, I2 = 2, 20, 128, 384            # M = 40 tokens (ragged vs tm=16)
    kx, k1, k2, k3 = jax.random.split(jax.random.PRNGKey(1), 4)
    x2 = jax.random.normal(kx, (B2, S2, H2), dtype=jnp.float32)
    w1b = jax.random.normal(k1, (I2, H2), dtype=jnp.float32) * (1.0 / H2 ** 0.5)
    w2b = jax.random.normal(k2, (I2, H2), dtype=jnp.float32) * (1.0 / H2 ** 0.5)
    w3b = jax.random.normal(k3, (H2, I2), dtype=jnp.float32) * (1.0 / I2 ** 0.5)

    out2 = jax.block_until_ready(
        feed_forward(x2, w1b, w2b, w3b, tm=16, ti=128))
    ref2 = feed_forward_ref(x2, w1b, w2b, w3b)
    assert out2.shape == (B2, S2, H2)
    assert jnp.allclose(out2, ref2, atol=1e-3, rtol=1e-3), "mismatch (tiled f32)"

    # --- Test 3: bf16 compute path (production dtype), loose check ---
    out3 = jax.block_until_ready(
        feed_forward(x2, w1b, w2b, w3b, tm=16, ti=128,
                     compute_dtype=jnp.bfloat16))
    assert out3.shape == (B2, S2, H2)
    assert bool(jnp.all(jnp.isfinite(out3)))
    rel = jnp.max(jnp.abs(out3.astype(jnp.float32) - ref2)) / (
        jnp.max(jnp.abs(ref2)) + 1e-6)
    assert float(rel) < 0.1, "bf16 path diverged too much"

    print("KERNEL_OK")
</pallas_src>

<mosaic_0001>
module attributes {stable_mosaic.version = 11 : i64} {
  func.func @_ffn_kernel(%arg0: i32, %arg1: i32, %arg2: memref<16x32xf32, #tpu.memory_space<vmem>>, %arg3: memref<32x256xf32, #tpu.memory_space<vmem>>, %arg4: memref<128x32xf32, #tpu.memory_space<vmem>>, %arg5: memref<16x32xf32, #tpu.memory_space<vmem>>, %arg6: memref<16x32xf32, #tpu.memory_space<vmem>>) attributes {dimension_semantics = [#tpu.dimension_semantics<parallel>, #tpu.dimension_semantics<arbitrary>], iteration_bounds = array<i64: 1, 1>, scalar_prefetch = 0 : i64, scratch_operands = 1 : i64, tpu.core_type = #tpu.core_type<tc>, window_params = [{transform_indices = @transform_0, window_bounds = array<i64: 16, 32>}, {transform_indices = @transform_1, window_bounds = array<i64: 32, 256>}, {transform_indices = @transform_2, window_bounds = array<i64: 128, 32>}, {transform_indices = @transform_3, window_bounds = array<i64: 16, 32>}]} {
    %c0_i32 = arith.constant 0 : i32
    %0 = arith.cmpi eq, %arg1, %c0_i32 : i32
    %1 = arith.extui %0 : i1 to i32
    %c0_i32_0 = arith.constant 0 : i32
    %2 = arith.cmpi ne, %1, %c0_i32_0 : i32
    scf.if %2 {
      %cst_14 = arith.constant 0.000000e+00 : f32
      %23 = vector.broadcast %cst_14 : f32 to vector<16x32xf32>
      %c0_15 = arith.constant 0 : index
      %c0_16 = arith.constant 0 : index
      %24 = vector.load %arg6[%c0_15, %c0_16] : memref<16x32xf32, #tpu.memory_space<vmem>>, vector<16x32xf32>
      tpu.vector_store %arg6[%c0_15, %c0_16], %23 {strides = array<i32>} : memref<16x32xf32, #tpu.memory_space<vmem>>, vector<16x32xf32>,
    } else {
    }
    %c0 = arith.constant 0 : index
    %c0_1 = arith.constant 0 : index
    %3 = vector.load %arg2[%c0, %c0_1] : memref<16x32xf32, #tpu.memory_space<vmem>>, vector<16x32xf32>
    %c0_2 = arith.constant 0 : index
    %c0_3 = arith.constant 0 : index
    %4 = vector.load %arg3[%c0_2, %c0_3] : memref<32x256xf32, #tpu.memory_space<vmem>>, vector<32x256xf32>
    %cst = arith.constant dense<0.000000e+00> : vector<16x256xf32>
    %5 = tpu.matmul %3, %4, %cst {dimension_numbers = #tpu.dot_dimension_numbers<[1], [0], [0], [1], [0, 0, 1, 1], [], []>} : vector<16x32xf32>, vector<32x256xf32>, vector<16x256xf32> -> vector<16x256xf32>
    %6 = vector.extract_strided_slice %5 {offsets = [0, 0], sizes = [16, 128], strides = [1, 1]} : vector<16x256xf32> to vector<16x128xf32>
    %7 = vector.extract_strided_slice %5 {offsets = [0, 128], sizes = [16, 128], strides = [1, 1]} : vector<16x256xf32> to vector<16x128xf32>
    %8 = arith.negf %6 : vector<16x128xf32>
    %9 = math.exp %8 : vector<16x128xf32>
    %cst_4 = arith.constant 1.000000e+00 : f32
    %10 = vector.broadcast %cst_4 : f32 to vector<16x128xf32>
    %11 = arith.addf %10, %9 : vector<16x128xf32>
    %12 = arith.divf %10, %11 : vector<16x128xf32>
    %13 = arith.mulf %6, %12 : vector<16x128xf32>
    %14 = arith.mulf %13, %7 : vector<16x128xf32>
    %c0_5 = arith.constant 0 : index
    %c0_6 = arith.constant 0 : index
    %15 = vector.load %arg6[%c0_5, %c0_6] : memref<16x32xf32, #tpu.memory_space<vmem>>, vector<16x32xf32>
    %c0_7 = arith.constant 0 : index
    %c0_8 = arith.constant 0 : index
    %16 = vector.load %arg4[%c0_7, %c0_8] : memref<128x32xf32, #tpu.memory_space<vmem>>, vector<128x32xf32>
    %cst_9 = arith.constant dense<0.000000e+00> : vector<16x32xf32>
    %17 = tpu.matmul %14, %16, %cst_9 {dimension_numbers = #tpu.dot_dimension_numbers<[1], [0], [0], [1], [0, 0, 1, 1], [], []>} : vector<16x128xf32>, vector<128x32xf32>, vector<16x32xf32> -> vector<16x32xf32>
    %18 = arith.addf %15, %17 : vector<16x32xf32>
    %c0_10 = arith.constant 0 : index
    %c0_11 = arith.constant 0 : index
    %19 = vector.load %arg6[%c0_10, %c0_11] : memref<16x32xf32, #tpu.memory_space<vmem>>, vector<16x32xf32>
    tpu.vector_store %arg6[%c0_10, %c0_11], %18 {strides = array<i32>} : memref<16x32xf32, #tpu.memory_space<vmem>>, vector<16x32xf32>,
    %c0_i32_12 = arith.constant 0 : i32
    %20 = arith.cmpi eq, %arg1, %c0_i32_12 : i32
    %21 = arith.extui %20 : i1 to i32
    %c0_i32_13 = arith.constant 0 : i32
    %22 = arith.cmpi ne, %21, %c0_i32_13 : i32
    scf.if %22 {
      %c0_14 = arith.constant 0 : index
      %c0_15 = arith.constant 0 : index
      %23 = vector.load %arg6[%c0_14, %c0_15] : memref<16x32xf32, #tpu.memory_space<vmem>>, vector<16x32xf32>
      %c0_16 = arith.constant 0 : index
      %c0_17 = arith.constant 0 : index
      %24 = vector.load %arg5[%c0_16, %c0_17] : memref<16x32xf32, #tpu.memory_space<vmem>>, vector<16x32xf32>
      tpu.vector_store %arg5[%c0_16, %c0_17], %23 {strides = array<i32>} : memref<16x32xf32, #tpu.memory_space<vmem>>, vector<16x32xf32>,
    } else {
    }
    return
  }
  func.func @transform_0(%arg0: i32, %arg1: i32) -> (i32, i32) {
    %c0_i32 = arith.constant 0 : i32
    %c0_i32_0 = arith.constant 0 : i32
    return %arg0, %c0_i32 : i32, i32
  }
  func.func @transform_1(%arg0: i32, %arg1: i32) -> (i32, i32) {
    %c0_i32 = arith.constant 0 : i32
    %c0_i32_0 = arith.constant 0 : i32
    return %c0_i32, %arg1 : i32, i32
  }
  func.func @transform_2(%arg0: i32, %arg1: i32) -> (i32, i32) {
    %c0_i32 = arith.constant 0 : i32
    %c0_i32_0 = arith.constant 0 : i32
    return %arg1, %c0_i32 : i32, i32
  }
  func.func @transform_3(%arg0: i32, %arg1: i32) -> (i32, i32) {
    %c0_i32 = arith.constant 0 : i32
    %c0_i32_0 = arith.constant 0 : i32
    return %arg0, %c0_i32 : i32, i32
  }
}

</mosaic_0001>

<llo_original>
// kernel: tpu_custom_call.1
$region0: #{tpu_custom_call.1}
  #allocation0 [shape = 'u32[]', space=smem, size = 0x4, offset = 0x4, fixed_abs, tag = 'smem constant byte address 0x4 - core index']
  #allocation1 [shape = 'u32[144,128]{1,0:T(1,128)}', space=vmem, size = 0x12000, scoped, tag = 'internal scratch']
  #allocation2 [shape = 'f32[16,32]{1,0:T(8,128)}', space=vmem, size = 0x2000, scoped, tag = 'scratch operand']
  %s0 = inlined_call_operand.vmem [shape: f32[16,32], index: 0, kind: input, shape index: {}]
  %s1 = inlined_call_operand.vmem [shape: f32[32,256], index: 1, kind: input, shape index: {}]
  %s2 = inlined_call_operand.vmem [shape: f32[128,32], index: 2, kind: input, shape index: {}]
  %s3 = inlined_call_operand.hbm [shape: f32[16,32], index: 3, kind: output, shape index: {}]
  %s4 = sld [smem:[#allocation0]]
  $region30: #{tpu_custom_call.1} parent=0
    _
  %s6 = ssub.s32 1, %s4
  %s7 = scalar_select 0, %s6, %s4
  $region1: #{tpu_custom_call.1} parent=0
    #allocation3 [shape = 'u8[8192]{0}', space=vmem, size = 0x2000, scoped, tag = 'output window, operand 0, single buffered']
    #allocation4 [shape = 's32[1]{0}', space=sflag, size = 0x4, scoped, tag = 'scoped memory for tpu_custom_call.1']
    %8 = vsyncpa [#allocation4], 0
    // Predicated region
    $region2: #{tpu_custom_call.1} parent=1 // pred_check
      _
    $region3: #{tpu_custom_call.1} parent=1 // pred_check_branch
      %10 = sbr.rel (0) target = $region5
    $region4: #{tpu_custom_call.1} parent=1 // pred_region
      _
    $region5: #{tpu_custom_call.1} parent=1 // pred_fallthru
      _
    // Predicated region
    $region6: #{tpu_custom_call.1} parent=1 // pred_check
      _
    $region7: #{tpu_custom_call.1} parent=1 // pred_check_branch
      %12 = sbr.rel (0) target = $region9
    $region8: #{tpu_custom_call.1} parent=1 // pred_region
      _
    $region9: #{tpu_custom_call.1} parent=1 // pred_fallthru
      _
    // Predicated region
    $region10: #{tpu_custom_call.1} parent=1 // pred_check
      _
    $region11: #{tpu_custom_call.1} parent=1 // pred_check_branch
      %14 = sbr.rel (0) target = $region13
    $region12: #{tpu_custom_call.1} parent=1 // pred_region
      _
    $region13: #{tpu_custom_call.1} parent=1 // pred_fallthru
      _
    %p15 = scmp.eq.s32.totalorder 0, 0
    // Predicated region
    $region14: #{tpu_custom_call.1} parent=1 // pred_check
      %p16 = pneg %p15
    $region15: #{tpu_custom_call.1} parent=1 // pred_check_branch
      %18 = sbr.rel (%p16) target = $region17
    $region16: #{tpu_custom_call.1} parent=1 // pred_region
      %vm19 = vcmask 261120
      %20 = vst.msk [vmem:[#allocation2] sm:$0xff] %vm19, 0.0
      %21 = vst.msk [vmem:[#allocation2 + $0x8] sm:$0xff] %vm19, 0.0
    $region17: #{tpu_custom_call.1} parent=1 // pred_fallthru
      _
    %v22 = vld [vmem:[%s0] sm:$0xff]
    %v23 = vld [vmem:[%s0 + $0x8] sm:$0xff]
    %v24 = vld [vmem:[%s1] sm:$0xff]
    %v25 = vld [vmem:[%s1 + $0x8] sm:$0xff]
    %v26 = vld [vmem:[%s1 + $0x10] sm:$0xff]
    %v27 = vld [vmem:[%s1 + $0x18] sm:$0xff]
    %v28 = vld [vmem:[%s1 + $0x20] sm:$0xff]
    %v29 = vld [vmem:[%s1 + $0x28] sm:$0xff]
    %v30 = vld [vmem:[%s1 + $0x30] sm:$0xff]
    %v31 = vld [vmem:[%s1 + $0x38] sm:$0xff]
    %vm32 = vcmask 261120
    %v34 = vsel %vm32, %v22, 0
    %v37 = vsel %vm32, %v23, 0
    %39 = vmatprep.subr.mxu0 %v25
    %40 = vmatpush1.msra.mxu0 %v24
    %41 = vmatprep.subr.mxu0 %v27
    %42 = vmatpush1.msra.mxu0 %v26
    %43 = vmatprep.subr.mxu0 %v29
    %44 = vmatpush1.msra.mxu0 %v28
    %45 = vmatprep.subr.mxu0 %v31
    %46 = vmatpush1.msra.mxu0 %v30
    %47 = vmatprep.subr.mxu0 0.0
    %48 = vmatpush1.msra.mxu0 0.0
    %49 = vmatprep.subr.mxu0 0.0
    %50 = vmatpush1.msra.mxu0 0.0
    %51 = vmatprep.subr.mxu0 0.0
    %52 = vmatpush1.msra.mxu0 0.0
    %53 = vmatprep.subr.mxu0 0.0
    %54 = vmatpush1.msra.mxu0 0.0
    %55 = vmatprep.subr.mxu0 0.0
    %56 = vmatpush1.msra.mxu0 0.0
    %57 = vmatprep.subr.mxu0 0.0
    %58 = vmatpush1.msra.mxu0 0.0
    %59 = vmatprep.subr.mxu0 0.0
    %60 = vmatpush1.msra.mxu0 0.0
    %61 = vmatprep.subr.mxu0 0.0
    %62 = vmatpush1.msra.mxu0 0.0
    %63 = vmatprep.subr.mxu0 0.0
    %64 = vmatpush1.msra.mxu0 0.0
    %65 = vmatprep.subr.mxu0 0.0
    %66 = vmatpush1.msra.mxu0 0.0
    %67 = vmatprep.subr.mxu0 0.0
    %68 = vmatpush1.msra.mxu0 0.0
    %69 = vmatprep.subr.mxu0 0.0
    %70 = vmatpush1.msra.mxu0 0.0
    %71 = vmatprep.subr.mxu0 0.0
    %72 = vmatpush1.msra.mxu0 0.0
    %73 = vmatprep.subr.mxu0 0.0
    %74 = vmatpush1.msra.mxu0 0.0
    %75 = vmatprep.subr.mxu0 0.0
    %76 = vmatpush1.msra.mxu0 0.0
    %77 = vmatprep.subr.mxu0 0.0
    %78 = vmatpush1.msra.mxu0 0.0
    %79 = vmatprep.subr.mxu0 0.0
    %80 = vmatpush1.msra.mxu0 0.0
    %81 = vmatprep.subr.mxu0 0.0
    %82 = vmatpush1.msra.mxu0 0.0
    %83 = vmatprep.subr.mxu0 0.0
    %84 = vmatpush1.msra.mxu0 0.0
    %85 = vmatprep.subr.mxu0 0.0
    %86 = vmatpush1.msra.mxu0 0.0
    %87 = vmatprep.subr.mxu0 0.0
    %88 = vmatpush1.msra.mxu0 0.0
    %89 = vmatprep.subr.mxu0 0.0
    %90 = vmatpush1.msra.mxu0 0.0
    %91 = vmatprep.subr.mxu0 0.0
    %92 = vmatpush1.msra.mxu0 0.0
    %93 = vmatprep.subr.mxu0 0.0
    %94 = vmatpush1.msra.mxu0 0.0
    %95 = vmatprep.subr.mxu0 0.0
    %96 = vmatpush1.msra.mxu0 0.0
    %97 = vmatprep.subr.mxu0 0.0
    %98 = vmatpush1.msra.mxu0 0.0
    %99 = vmatprep.subr.mxu0 0.0
    %100 = vmatpush1.msra.mxu0 0.0
    %101 = vmatprep.subr.mxu0 0.0
    %102 = vmatpush1.msra.mxu0 0.0
    %103 = vmatprep.mubr.f32.mxu0 0.0
    %104 = vmatmul.mubr.f32.gmra.mrb[0].mxu0 %v34
    %v105 = vpop.f32.mrb[0].mxu0
    %v106 = vadd.f32 0.0, %v105
    %v107 = vpop.f32.mrb[0].mxu0
    %v108 = vadd.f32 0.0, %v107
    %109 = vmatprep.mubr.f32.mxu0 0.0
    %110 = vmatmul.mubr.f32.gmra.mrb[0].mxu0 %v37
    %v111 = vpop.f32.mrb[0].mxu0
    %v112 = vadd.f32 0.0, %v111
    %v113 = vpop.f32.mrb[0].mxu0
    %v114 = vadd.f32 0.0, %v113
    %115 = vdwg.mxu0
    %v116 = vxor.u32 %v106, 2147483648
    %v117 = vxor.u32 %v112, 2147483648
    %v118 = vmul.f32 %v116, 1.442695
    %v119 = vpow.pop %v118
    %v120 = vmul.f32 %v117, 1.442695
    %v121 = vpow.pop %v120
    %v122 = vadd.f32 %v119, 1.0
    %v123 = vadd.f32 %v121, 1.0
    %v124 = vrcp.pop %v122
    %v125 = vmul.f32 1.0, %v124
    %v126 = vrcp.pop %v123
    %v127 = vmul.f32 1.0, %v126
    %v128 = vmul.f32 %v106, %v125
    %v129 = vmul.f32 %v112, %v127
    %v130 = vmul.f32 %v128, %v108
    %v131 = vmul.f32 %v129, %v114
    %v132 = vld [vmem:[#allocation2] sm:$0xff]
    %v133 = vld [vmem:[#allocation2 + $0x8] sm:$0xff]
    %v134 = vld [vmem:[%s2] sm:$0xff]
    %v135 = vld [vmem:[%s2 + $0x8] sm:$0xff]
    %v136 = vld [vmem:[%s2 + $0x10] sm:$0xff]
    %v137 = vld [vmem:[%s2 + $0x18] sm:$0xff]
    %v138 = vld [vmem:[%s2 + $0x20] sm:$0xff]
    %v139 = vld [vmem:[%s2 + $0x28] sm:$0xff]
    %v140 = vld [vmem:[%s2 + $0x30] sm:$0xff]
    %v141 = vld [vmem:[%s2 + $0x38] sm:$0xff]
    %v142 = vld [vmem:[%s2 + $0x40] sm:$0xff]
    %v143 = vld [vmem:[%s2 + $0x48] sm:$0xff]
    %v144 = vld [vmem:[%s2 + $0x50] sm:$0xff]
    %v145 = vld [vmem:[%s2 + $0x58] sm:$0xff]
    %v146 = vld [vmem:[%s2 + $0x60] sm:$0xff]
    %v147 = vld [vmem:[%s2 + $0x68] sm:$0xff]
    %v148 = vld [vmem:[%s2 + $0x70] sm:$0xff]
    %v149 = vld [vmem:[%s2 + $0x78] sm:$0xff]
    %150 = vmatprep.subr.mxu0 0.0
    %151 = vmatpush1.msra.mxu0 %v134
    %152 = vmatprep.subr.mxu0 0.0
    %153 = vmatpush1.msra.mxu0 %v135
    %154 = vmatprep.subr.mxu0 0.0
    %155 = vmatpush1.msra.mxu0 %v136
    %156 = vmatprep.subr.mxu0 0.0
    %157 = vmatpush1.msra.mxu0 %v137
    %158 = vmatprep.subr.mxu0 0.0
    %159 = vmatpush1.msra.mxu0 %v138
    %160 = vmatprep.subr.mxu0 0.0
    %161 = vmatpush1.msra.mxu0 %v139
    %162 = vmatprep.subr.mxu0 0.0
    %163 = vmatpush1.msra.mxu0 %v140
    %164 = vmatprep.subr.mxu0 0.0
    %165 = vmatpush1.msra.mxu0 %v141
    %166 = vmatprep.subr.mxu0 0.0
    %167 = vmatpush1.msra.mxu0 %v142
    %168 = vmatprep.subr.mxu0 0.0
    %169 = vmatpush1.msra.mxu0 %v143
    %170 = vmatprep.subr.mxu0 0.0
    %171 = vmatpush1.msra.mxu0 %v144
    %172 = vmatprep.subr.mxu0 0.0
    %173 = vmatpush1.msra.mxu0 %v145
    %174 = vmatprep.subr.mxu0 0.0
    %175 = vmatpush1.msra.mxu0 %v146
    %176 = vmatprep.subr.mxu0 0.0
    %177 = vmatpush1.msra.mxu0 %v147
    %178 = vmatprep.subr.mxu0 0.0
    %179 = vmatpush1.msra.mxu0 %v148
    %180 = vmatprep.subr.mxu0 0.0
    %181 = vmatpush1.msra.mxu0 %v149
    %182 = vmatprep.subr.mxu0 0.0
    %183 = vmatpush1.msra.mxu0 0.0
    %184 = vmatprep.subr.mxu0 0.0
    %185 = vmatpush1.msra.mxu0 0.0
    %186 = vmatprep.subr.mxu0 0.0
    %187 = vmatpush1.msra.mxu0 0.0
    %188 = vmatprep.subr.mxu0 0.0
    %189 = vmatpush1.msra.mxu0 0.0
    %190 = vmatprep.subr.mxu0 0.0
    %191 = vmatpush1.msra.mxu0 0.0
    %192 = vmatprep.subr.mxu0 0.0
    %193 = vmatpush1.msra.mxu0 0.0
    %194 = vmatprep.subr.mxu0 0.0
    %195 = vmatpush1.msra.mxu0 0.0
    %196 = vmatprep.subr.mxu0 0.0
    %197 = vmatpush1.msra.mxu0 0.0
    %198 = vmatprep.subr.mxu0 0.0
    %199 = vmatpush1.msra.mxu0 0.0
    %200 = vmatprep.subr.mxu0 0.0
    %201 = vmatpush1.msra.mxu0 0.0
    %202 = vmatprep.subr.mxu0 0.0
    %203 = vmatpush1.msra.mxu0 0.0
    %204 = vmatprep.subr.mxu0 0.0
    %205 = vmatpush1.msra.mxu0 0.0
    %206 = vmatprep.subr.mxu0 0.0
    %207 = vmatpush1.msra.mxu0 0.0
    %208 = vmatprep.subr.mxu0 0.0
    %209 = vmatpush1.msra.mxu0 0.0
    %210 = vmatprep.subr.mxu0 0.0
    %211 = vmatpush1.msra.mxu0 0.0
    %212 = vmatprep.subr.mxu0 0.0
    %213 = vmatpush1.msra.mxu0 0.0
    %214 = vmatprep.mubr.f32.mxu0 0.0
    %215 = vmatmul.mubr.f32.gmra.mrb[0].mxu0 %v130
    %v216 = vpop.f32.mrb[0].mxu0
    %v217 = vadd.f32 0.0, %v216
    %v218 = vpop.f32.mrb[0].mxu0
    %219 = vmatprep.mubr.f32.mxu0 0.0
    %220 = vmatmul.mubr.f32.gmra.mrb[0].mxu0 %v131
    %v221 = vpop.f32.mrb[0].mxu0
    %v222 = vadd.f32 0.0, %v221
    %v223 = vpop.f32.mrb[0].mxu0
    %224 = vdwg.mxu0
    %v225 = vadd.f32 %v132, %v217
    %v226 = vadd.f32 %v133, %v222
    %227 = vst.msk [vmem:[#allocation2] sm:$0xff] %vm32, %v225
    %228 = vst.msk [vmem:[#allocation2 + $0x8] sm:$0xff] %vm32, %v226
    // Predicated region
    $region18: #{tpu_custom_call.1} parent=1 // pred_check
      %p229 = pneg %p15
    $region19: #{tpu_custom_call.1} parent=1 // pred_check_branch
      %231 = sbr.rel (%p229) target = $region21
    $region20: #{tpu_custom_call.1} parent=1 // pred_region
      %v232 = vld [vmem:[#allocation2] sm:$0xff]
      %v233 = vld [vmem:[#allocation2 + $0x8] sm:$0xff]
      %234 = vst.msk [vmem:[#allocation3] sm:$0xff] %vm32, %v232
      %235 = vst.msk [vmem:[#allocation3 + $0x8] sm:$0xff] %vm32, %v233
    $region21: #{tpu_custom_call.1} parent=1 // pred_fallthru
      _
    // Predicated region
    $region22: #{tpu_custom_call.1} parent=1 // pred_check
      _
    $region23: #{tpu_custom_call.1} parent=1 // pred_check_branch
      %237 = sbr.rel (0) target = $region25
    $region24: #{tpu_custom_call.1} parent=1 // pred_region
      %s239 = ssub.s32 256, 256
      %240 = vsyncadd [#allocation4], %s239
      %s241 = sshll.u32 [#allocation3], 4
      %s242 = int_to_ptr.vmem [resolvable:$true] %s241
      %247 = dma.vmem_to_hbm [thread:$0]  %s242, 256, %s3, [#allocation4], 128, 128, 8
    $region25: #{tpu_custom_call.1} parent=1 // pred_fallthru
      _
    // Predicated region
    $region26: #{tpu_custom_call.1} parent=1 // pred_check
      _
    $region27: #{tpu_custom_call.1} parent=1 // pred_check_branch
      %249 = sbr.rel (0) target = $region29
    $region28: #{tpu_custom_call.1} parent=1 // pred_region
      %250 = dma.done [#allocation4], 256
    $region29: #{tpu_custom_call.1} parent=1 // pred_fallthru
      _
    %251 = vsyncpa [#allocation4], 1

</llo_original>
